<compile_context>
chip_gen: v6e
topology: v6e:2x2x1
jax: 0.10.0
libtpu: 0.0.40
codegen_flags: <defaults>
</compile_context>

<pallas_src>
import functools
import math

import jax
import jax.numpy as jnp
from jax.experimental import pallas as pl
from jax.experimental.pallas import tpu as pltpu


def _encoder_kernel(x_ref, w1_ref, b1_ref, w2_ref, b2_ref, o_ref):
    # x_ref:  (block_rows, pack*in)
    # w1_ref: (pack*in,  pack*hid)   b1_ref: (1, pack*hid)
    # w2_ref: (pack*hid, pack*out)   b2_ref: (1, pack*out)
    # o_ref:  (block_rows, pack*out)
    x = x_ref[...]
    h = jnp.dot(x, w1_ref[...], preferred_element_type=jnp.float32) + b1_ref[...]
    h = jnp.maximum(h, 0.0)
    y = jnp.dot(h, w2_ref[...], preferred_element_type=jnp.float32) + b2_ref[...]
    o_ref[...] = jnp.maximum(y, 0.0).astype(o_ref.dtype)


def _round_up(a, b):
    return ((a + b - 1) // b) * b


def _choose_pack(input_size, output_size, lane=128):
    """Smallest particle-pack factor making both in/out lane-dense (mult of 128)."""
    need_in = lane // math.gcd(input_size, lane)
    need_out = lane // math.gcd(output_size, lane)
    return math.lcm(need_in, need_out)  # always <= 128


@functools.partial(jax.jit, static_argnames=("block_particles",))
def particle_encoder(x, w1, b1, w2, b2, *, block_particles=8192):
    """Fused MLP encoder: relu(relu(x @ W1 + b1) @ W2 + b2).

    Args:
      x:  [N, input_size] float32
      w1: [input_size, hidden]  b1: [1, hidden]   (W stored transposed vs torch)
      w2: [hidden, output]      b2: [1, output]
    Returns:
      [N, output] float32
    """
    n, input_size = x.shape
    hidden = w1.shape[1]
    output = w2.shape[1]

    pack = _choose_pack(input_size, output)

    # Block-diagonal weight replication keeps the math exact:
    #   y_packed = relu(relu(x_packed @ (I (x) W1) + tile(b1)) @ (I (x) W2) + tile(b2))
    eye = jnp.eye(pack, dtype=x.dtype)
    w1p = jnp.kron(eye, w1.astype(x.dtype))                            # [pack*in,  pack*hid]
    w2p = jnp.kron(eye, w2.astype(x.dtype))                            # [pack*hid, pack*out]
    b1p = jnp.tile(b1.reshape(1, hidden).astype(x.dtype), (1, pack))   # [1, pack*hid]
    b2p = jnp.tile(b2.reshape(1, output).astype(x.dtype), (1, pack))   # [1, pack*out]

    in_p = pack * input_size
    hid_p = pack * hidden
    out_p = pack * output

    # Tile along the (packed) particle axis.
    rows = pl.cdiv(n, pack)                                  # packed rows needed
    block_rows = max(8, _round_up(block_particles, pack) // pack)
    block_rows = _round_up(block_rows, 8)                    # sublane alignment
    block_rows = min(block_rows, _round_up(rows, 8))         # don't over-pad tiny N
    padded_rows = _round_up(rows, block_rows)
    padded_n = padded_rows * pack

    x_pad = jnp.zeros((padded_n, input_size), x.dtype).at[:n].set(x)
    x_packed = x_pad.reshape(padded_rows, in_p)              # contiguous, lane-dense

    grid = (padded_rows // block_rows,)

    # Cost of what the kernel *actually* executes (block-diagonal matmuls).
    cost = pl.CostEstimate(
        flops=2 * padded_rows * (in_p * hid_p + hid_p * out_p),
        transcendentals=0,
        bytes_accessed=4 * (padded_rows * (in_p + out_p)
                            + in_p * hid_p + hid_p * out_p + hid_p + out_p),
    )

    y_packed = pl.pallas_call(
        _encoder_kernel,
        out_shape=jax.ShapeDtypeStruct((padded_rows, out_p), x.dtype),
        grid_spec=pltpu.PrefetchScalarGridSpec(
            num_scalar_prefetch=0,
            grid=grid,
            in_specs=[
                # particle tile of packed x (lane-dense, 128-lane multiple)
                pl.BlockSpec((block_rows, in_p), lambda i: (i, 0)),
                # packed weights / biases: full arrays, resident across the grid
                pl.BlockSpec((in_p, hid_p), lambda i: (0, 0)),
                pl.BlockSpec((1, hid_p), lambda i: (0, 0)),
                pl.BlockSpec((hid_p, out_p), lambda i: (0, 0)),
                pl.BlockSpec((1, out_p), lambda i: (0, 0)),
            ],
            out_specs=pl.BlockSpec((block_rows, out_p), lambda i: (i, 0)),
        ),
        compiler_params=pltpu.CompilerParams(
            dimension_semantics=("parallel",),
        ),
        cost_estimate=cost,
    )(x_packed, w1p, b1p, w2p, b2p)

    # Unpack: [padded_rows, pack*out] -> [padded_n, out] -> drop padding rows.
    return y_packed.reshape(padded_n, output)[:n]


def init_params(key, input_size, hidden_size, output_size):
    """Deterministic init mimicking torch.nn.Linear defaults (uniform +/- 1/sqrt(fan_in))."""
    k1, k2, k3, k4 = jax.random.split(key, 4)
    bound1 = 1.0 / jnp.sqrt(jnp.float32(input_size))
    bound2 = 1.0 / jnp.sqrt(jnp.float32(hidden_size))
    w1 = jax.random.uniform(k1, (input_size, hidden_size), jnp.float32, -bound1, bound1)
    b1 = jax.random.uniform(k2, (1, hidden_size), jnp.float32, -bound1, bound1)
    w2 = jax.random.uniform(k3, (hidden_size, output_size), jnp.float32, -bound2, bound2)
    b2 = jax.random.uniform(k4, (1, output_size), jnp.float32, -bound2, bound2)
    return w1, b1, w2, b2


def reference(x, w1, b1, w2, b2):
    h = jnp.maximum(x @ w1 + b1, 0.0)
    return jnp.maximum(h @ w2 + b2, 0.0)


if __name__ == "__main__":
    # Small shapes consistent with the module's forward: x: [n_particles, input_size]
    input_size = 16
    hidden_size = 32
    output_size = 16

    key = jax.random.PRNGKey(0)
    kx, kp, kx2, kx3 = jax.random.split(key, 4)
    w1, b1, w2, b2 = init_params(kp, input_size, hidden_size, output_size)

    # Case 1: particle count that tiles evenly.
    n_particles = 128
    x = jax.random.normal(kx, (n_particles, input_size), jnp.float32)
    y = jax.block_until_ready(particle_encoder(x, w1, b1, w2, b2))
    y_ref = reference(x, w1, b1, w2, b2)
    assert y.shape == (n_particles, output_size)
    assert jnp.allclose(y, y_ref, atol=1e-5, rtol=1e-5), "mismatch vs pure-JAX reference"

    # Case 2: ragged particle count (not a multiple of pack/tile) — exercises padding.
    n_particles2 = 100
    x2 = jax.random.normal(kx2, (n_particles2, input_size), jnp.float32)
    y2 = jax.block_until_ready(particle_encoder(x2, w1, b1, w2, b2))
    y2_ref = reference(x2, w1, b1, w2, b2)
    assert y2.shape == (n_particles2, output_size)
    assert jnp.allclose(y2, y2_ref, atol=1e-5, rtol=1e-5), "mismatch (ragged N)"

    # Case 3: larger particle count spanning multiple grid steps.
    n_particles3 = 20000
    x3 = jax.random.normal(kx3, (n_particles3, input_size), jnp.float32)
    y3 = jax.block_until_ready(particle_encoder(x3, w1, b1, w2, b2))
    y3_ref = reference(x3, w1, b1, w2, b2)
    assert y3.shape == (n_particles3, output_size)
    assert jnp.allclose(y3, y3_ref, atol=1e-5, rtol=1e-5), "mismatch (multi-tile N)"

    print("KERNEL_OK")
</pallas_src>

<mosaic_0001>
module attributes {stable_mosaic.version = 11 : i64} {
  func.func @_encoder_kernel(%arg0: i32, %arg1: memref<16x128xf32, #tpu.memory_space<vmem>>, %arg2: memref<128x256xf32, #tpu.memory_space<vmem>>, %arg3: memref<1x256xf32, #tpu.memory_space<vmem>>, %arg4: memref<256x128xf32, #tpu.memory_space<vmem>>, %arg5: memref<1x128xf32, #tpu.memory_space<vmem>>, %arg6: memref<16x128xf32, #tpu.memory_space<vmem>>) attributes {dimension_semantics = [#tpu.dimension_semantics<parallel>], iteration_bounds = array<i64: 1>, scalar_prefetch = 0 : i64, scratch_operands = 0 : i64, tpu.core_type = #tpu.core_type<tc>, window_params = [{transform_indices = @transform_0, window_bounds = array<i64: 16, 128>}, {pipeline_mode = #tpu.pipeline_mode<synchronous>, transform_indices = @transform_1, window_bounds = array<i64: 128, 256>}, {pipeline_mode = #tpu.pipeline_mode<synchronous>, transform_indices = @transform_2, window_bounds = array<i64: 1, 256>}, {pipeline_mode = #tpu.pipeline_mode<synchronous>, transform_indices = @transform_3, window_bounds = array<i64: 256, 128>}, {pipeline_mode = #tpu.pipeline_mode<synchronous>, transform_indices = @transform_4, window_bounds = array<i64: 1, 128>}, {transform_indices = @transform_5, window_bounds = array<i64: 16, 128>}]} {
    %c0 = arith.constant 0 : index
    %c0_0 = arith.constant 0 : index
    %0 = vector.load %arg1[%c0, %c0_0] : memref<16x128xf32, #tpu.memory_space<vmem>>, vector<16x128xf32>
    %c0_1 = arith.constant 0 : index
    %c0_2 = arith.constant 0 : index
    %1 = vector.load %arg2[%c0_1, %c0_2] : memref<128x256xf32, #tpu.memory_space<vmem>>, vector<128x256xf32>
    %cst = arith.constant dense<0.000000e+00> : vector<16x256xf32>
    %2 = tpu.matmul %0, %1, %cst {dimension_numbers = #tpu.dot_dimension_numbers<[1], [0], [0], [1], [0, 0, 1, 1], [], []>} : vector<16x128xf32>, vector<128x256xf32>, vector<16x256xf32> -> vector<16x256xf32>
    %c0_3 = arith.constant 0 : index
    %c0_4 = arith.constant 0 : index
    %3 = vector.load %arg3[%c0_3, %c0_4] : memref<1x256xf32, #tpu.memory_space<vmem>>, vector<1x256xf32>
    %4 = vector.broadcast %3 : vector<1x256xf32> to vector<16x256xf32>
    %5 = arith.addf %2, %4 : vector<16x256xf32>
    %cst_5 = arith.constant 0.000000e+00 : f32
    %6 = vector.broadcast %cst_5 : f32 to vector<16x256xf32>
    %7 = arith.maximumf %5, %6 : vector<16x256xf32>
    %c0_6 = arith.constant 0 : index
    %c0_7 = arith.constant 0 : index
    %8 = vector.load %arg4[%c0_6, %c0_7] : memref<256x128xf32, #tpu.memory_space<vmem>>, vector<256x128xf32>
    %cst_8 = arith.constant dense<0.000000e+00> : vector<16x128xf32>
    %9 = tpu.matmul %7, %8, %cst_8 {dimension_numbers = #tpu.dot_dimension_numbers<[1], [0], [0], [1], [0, 0, 1, 1], [], []>} : vector<16x256xf32>, vector<256x128xf32>, vector<16x128xf32> -> vector<16x128xf32>
    %c0_9 = arith.constant 0 : index
    %c0_10 = arith.constant 0 : index
    %10 = vector.load %arg5[%c0_9, %c0_10] : memref<1x128xf32, #tpu.memory_space<vmem>>, vector<1x128xf32>
    %11 = vector.broadcast %10 : vector<1x128xf32> to vector<16x128xf32>
    %12 = arith.addf %9, %11 : vector<16x128xf32>
    %cst_11 = arith.constant 0.000000e+00 : f32
    %13 = vector.broadcast %cst_11 : f32 to vector<16x128xf32>
    %14 = arith.maximumf %12, %13 : vector<16x128xf32>
    %c0_12 = arith.constant 0 : index
    %c0_13 = arith.constant 0 : index
    %15 = vector.load %arg6[%c0_12, %c0_13] : memref<16x128xf32, #tpu.memory_space<vmem>>, vector<16x128xf32>
    tpu.vector_store %arg6[%c0_12, %c0_13], %14 {strides = array<i32>} : memref<16x128xf32, #tpu.memory_space<vmem>>, vector<16x128xf32>,
    return
  }
  func.func @transform_0(%arg0: i32) -> (i32, i32) {
    %c0_i32 = arith.constant 0 : i32
    %c0_i32_0 = arith.constant 0 : i32
    return %arg0, %c0_i32 : i32, i32
  }
  func.func @transform_1(%arg0: i32) -> (i32, i32) {
    %c0_i32 = arith.constant 0 : i32
    %c0_i32_0 = arith.constant 0 : i32
    %c0_i32_1 = arith.constant 0 : i32
    return %c0_i32, %c0_i32_0 : i32, i32
  }
  func.func @transform_2(%arg0: i32) -> (i32, i32) {
    %c0_i32 = arith.constant 0 : i32
    %c0_i32_0 = arith.constant 0 : i32
    %c0_i32_1 = arith.constant 0 : i32
    return %c0_i32, %c0_i32_0 : i32, i32
  }
  func.func @transform_3(%arg0: i32) -> (i32, i32) {
    %c0_i32 = arith.constant 0 : i32
    %c0_i32_0 = arith.constant 0 : i32
    %c0_i32_1 = arith.constant 0 : i32
    return %c0_i32, %c0_i32_0 : i32, i32
  }
  func.func @transform_4(%arg0: i32) -> (i32, i32) {
    %c0_i32 = arith.constant 0 : i32
    %c0_i32_0 = arith.constant 0 : i32
    %c0_i32_1 = arith.constant 0 : i32
    return %c0_i32, %c0_i32_0 : i32, i32
  }
  func.func @transform_5(%arg0: i32) -> (i32, i32) {
    %c0_i32 = arith.constant 0 : i32
    %c0_i32_0 = arith.constant 0 : i32
    return %arg0, %c0_i32 : i32, i32
  }
}

</mosaic_0001>

<llo_original>
// kernel: particle_encoder.1
$region0: #{particle_encoder.1}
  #allocation0 [shape = 'u32[]', space=smem, size = 0x4, offset = 0x4, fixed_abs, tag = 'smem constant byte address 0x4 - core index']
  #allocation1 [shape = 'u32[144,128]{1,0:T(1,128)}', space=vmem, size = 0x12000, scoped, tag = 'internal scratch']
  %s0 = inlined_call_operand.vmem [shape: f32[16,128], index: 0, kind: input, shape index: {}]
  %s1 = inlined_call_operand.vmem [shape: f32[128,256], index: 1, kind: input, shape index: {}]
  %s2 = inlined_call_operand.vmem [shape: f32[1,256], index: 2, kind: input, shape index: {}]
  %s3 = inlined_call_operand.vmem [shape: f32[256,128], index: 3, kind: input, shape index: {}]
  %s4 = inlined_call_operand.vmem [shape: f32[1,128], index: 4, kind: input, shape index: {}]
  %s5 = inlined_call_operand.vmem [shape: f32[16,128], index: 5, kind: output, shape index: {}]
  %s6 = sld [smem:[#allocation0]]
  $region30: #{particle_encoder.1} parent=0
    _
  %s8 = ssub.s32 1, %s6
  %s9 = scalar_select 0, %s8, %s6
  // Predicated region
  $region2: #{particle_encoder.1} parent=0 // pred_check
    _
  $region3: #{particle_encoder.1} parent=0 // pred_check_branch
    %11 = sbr.rel (0) target = $region5
  $region4: #{particle_encoder.1} parent=0 // pred_region
    _
  $region5: #{particle_encoder.1} parent=0 // pred_fallthru
    _
  // Predicated region
  $region6: #{particle_encoder.1} parent=0 // pred_check
    _
  $region7: #{particle_encoder.1} parent=0 // pred_check_branch
    %13 = sbr.rel (0) target = $region9
  $region8: #{particle_encoder.1} parent=0 // pred_region
    _
  $region9: #{particle_encoder.1} parent=0 // pred_fallthru
    _
  // Predicated region
  $region10: #{particle_encoder.1} parent=0 // pred_check
    _
  $region11: #{particle_encoder.1} parent=0 // pred_check_branch
    %15 = sbr.rel (0) target = $region13
  $region12: #{particle_encoder.1} parent=0 // pred_region
    _
  $region13: #{particle_encoder.1} parent=0 // pred_fallthru
    _
  // Predicated region
  $region14: #{particle_encoder.1} parent=0 // pred_check
    _
  $region15: #{particle_encoder.1} parent=0 // pred_check_branch
    %17 = sbr.rel (0) target = $region17
  $region16: #{particle_encoder.1} parent=0 // pred_region
    _
  $region17: #{particle_encoder.1} parent=0 // pred_fallthru
    _
  // Predicated region
  $region18: #{particle_encoder.1} parent=0 // pred_check
    _
  $region19: #{particle_encoder.1} parent=0 // pred_check_branch
    %19 = sbr.rel (0) target = $region21
  $region20: #{particle_encoder.1} parent=0 // pred_region
    _
  $region21: #{particle_encoder.1} parent=0 // pred_fallthru
    _
  %v20 = vld [vmem:[%s0] sm:$0xff]
  %v21 = vld [vmem:[%s0 + $0x8] sm:$0xff]
  %v22 = vld [vmem:[%s1] sm:$0xff]
  %v23 = vld [vmem:[%s1 + $0x8] sm:$0xff]
  %v24 = vld [vmem:[%s1 + $0x10] sm:$0xff]
  %v25 = vld [vmem:[%s1 + $0x18] sm:$0xff]
  %v26 = vld [vmem:[%s1 + $0x20] sm:$0xff]
  %v27 = vld [vmem:[%s1 + $0x28] sm:$0xff]
  %v28 = vld [vmem:[%s1 + $0x30] sm:$0xff]
  %v29 = vld [vmem:[%s1 + $0x38] sm:$0xff]
  %v30 = vld [vmem:[%s1 + $0x40] sm:$0xff]
  %v31 = vld [vmem:[%s1 + $0x48] sm:$0xff]
  %v32 = vld [vmem:[%s1 + $0x50] sm:$0xff]
  %v33 = vld [vmem:[%s1 + $0x58] sm:$0xff]
  %v34 = vld [vmem:[%s1 + $0x60] sm:$0xff]
  %v35 = vld [vmem:[%s1 + $0x68] sm:$0xff]
  %v36 = vld [vmem:[%s1 + $0x70] sm:$0xff]
  %v37 = vld [vmem:[%s1 + $0x78] sm:$0xff]
  %v38 = vld [vmem:[%s1 + $0x80] sm:$0xff]
  %v39 = vld [vmem:[%s1 + $0x88] sm:$0xff]
  %v40 = vld [vmem:[%s1 + $0x90] sm:$0xff]
  %v41 = vld [vmem:[%s1 + $0x98] sm:$0xff]
  %v42 = vld [vmem:[%s1 + $0xa0] sm:$0xff]
  %v43 = vld [vmem:[%s1 + $0xa8] sm:$0xff]
  %v44 = vld [vmem:[%s1 + $0xb0] sm:$0xff]
  %v45 = vld [vmem:[%s1 + $0xb8] sm:$0xff]
  %v46 = vld [vmem:[%s1 + $0xc0] sm:$0xff]
  %v47 = vld [vmem:[%s1 + $0xc8] sm:$0xff]
  %v48 = vld [vmem:[%s1 + $0xd0] sm:$0xff]
  %v49 = vld [vmem:[%s1 + $0xd8] sm:$0xff]
  %v50 = vld [vmem:[%s1 + $0xe0] sm:$0xff]
  %v51 = vld [vmem:[%s1 + $0xe8] sm:$0xff]
  %v52 = vld [vmem:[%s1 + $0xf0] sm:$0xff]
  %v53 = vld [vmem:[%s1 + $0xf8] sm:$0xff]
  %v54 = vld [vmem:[%s2] sm:$0x3]
  %v56 = vlaneseq
  %v57 = vshrl.u32 %v56, 7
  %v58 = vsub.s32 0, %v57
  %v59 = vrot.slane %v54, %v58
  %v60 = vlaneseq
  %v61 = vshrl.u32 %v60, 7
  %v62 = vsub.s32 1, %v61
  %v63 = vrot.slane %v54, %v62
  %66 = vmatprep.subr.mxu0 %v53
  %67 = vmatpush1.msra.mxu0 %v52
  %68 = vmatprep.subr.mxu0 %v51
  %69 = vmatpush1.msra.mxu0 %v50
  %70 = vmatprep.subr.mxu0 %v49
  %71 = vmatpush1.msra.mxu0 %v48
  %72 = vmatprep.subr.mxu0 %v47
  %73 = vmatpush1.msra.mxu0 %v46
  %74 = vmatprep.subr.mxu0 %v45
  %75 = vmatpush1.msra.mxu0 %v44
  %76 = vmatprep.subr.mxu0 %v43
  %77 = vmatpush1.msra.mxu0 %v42
  %78 = vmatprep.subr.mxu0 %v41
  %79 = vmatpush1.msra.mxu0 %v40
  %80 = vmatprep.subr.mxu0 %v39
  %81 = vmatpush1.msra.mxu0 %v38
  %82 = vmatprep.subr.mxu0 %v37
  %83 = vmatpush1.msra.mxu0 %v36
  %84 = vmatprep.subr.mxu0 %v35
  %85 = vmatpush1.msra.mxu0 %v34
  %86 = vmatprep.subr.mxu0 %v33
  %87 = vmatpush1.msra.mxu0 %v32
  %88 = vmatprep.subr.mxu0 %v31
  %89 = vmatpush1.msra.mxu0 %v30
  %90 = vmatprep.subr.mxu0 %v29
  %91 = vmatpush1.msra.mxu0 %v28
  %92 = vmatprep.subr.mxu0 %v27
  %93 = vmatpush1.msra.mxu0 %v26
  %94 = vmatprep.subr.mxu0 %v25
  %95 = vmatpush1.msra.mxu0 %v24
  %96 = vmatprep.subr.mxu0 %v23
  %97 = vmatpush1.msra.mxu0 %v22
  %98 = vmatprep.subr.mxu0 0.0
  %99 = vmatpush2.msra.mxu0 0.0
  %100 = vmatprep.subr.mxu0 0.0
  %101 = vmatpush2.msra.mxu0 0.0
  %102 = vmatprep.subr.mxu0 0.0
  %103 = vmatpush2.msra.mxu0 0.0
  %104 = vmatprep.subr.mxu0 0.0
  %105 = vmatpush2.msra.mxu0 0.0
  %106 = vmatprep.subr.mxu0 0.0
  %107 = vmatpush2.msra.mxu0 0.0
  %108 = vmatprep.subr.mxu0 0.0
  %109 = vmatpush2.msra.mxu0 0.0
  %110 = vmatprep.subr.mxu0 0.0
  %111 = vmatpush2.msra.mxu0 0.0
  %112 = vmatprep.subr.mxu0 0.0
  %113 = vmatpush2.msra.mxu0 0.0
  %114 = vmatprep.subr.mxu0 0.0
  %115 = vmatpush2.msra.mxu0 0.0
  %116 = vmatprep.subr.mxu0 0.0
  %117 = vmatpush2.msra.mxu0 0.0
  %118 = vmatprep.subr.mxu0 0.0
  %119 = vmatpush2.msra.mxu0 0.0
  %120 = vmatprep.subr.mxu0 0.0
  %121 = vmatpush2.msra.mxu0 0.0
  %122 = vmatprep.subr.mxu0 0.0
  %123 = vmatpush2.msra.mxu0 0.0
  %124 = vmatprep.subr.mxu0 0.0
  %125 = vmatpush2.msra.mxu0 0.0
  %126 = vmatprep.subr.mxu0 0.0
  %127 = vmatpush2.msra.mxu0 0.0
  %128 = vmatprep.subr.mxu0 0.0
  %129 = vmatpush2.msra.mxu0 0.0
  %130 = vmatprep.mubr.f32.mxu0 0.0
  %131 = vmatmul.mubr.f32.gmra.mxu0 %v20
  %v132 = vpop.f32.mrf.mxu0
  %v133 = vadd.f32 %v59, %v132
  %v134 = vpop.f32.mrf.mxu0
  %v135 = vadd.f32 %v63, %v134
  %136 = vmatprep.mubr.f32.mxu0 0.0
  %137 = vmatmul.mubr.f32.gmra.mxu0 %v21
  %v138 = vpop.f32.mrf.mxu0
  %v139 = vadd.f32 %v59, %v138
  %v140 = vpop.f32.mrf.mxu0
  %v141 = vadd.f32 %v63, %v140
  %142 = vdwg.mxu0
  %v143 = vmax.f32 %v133, 0.0
  %v144 = vmax.f32 %v135, 0.0
  %v145 = vmax.f32 %v139, 0.0
  %v146 = vmax.f32 %v141, 0.0
  %v147 = vld [vmem:[%s3] sm:$0xff]
  %v148 = vld [vmem:[%s3 + $0x8] sm:$0xff]
  %v149 = vld [vmem:[%s3 + $0x10] sm:$0xff]
  %v150 = vld [vmem:[%s3 + $0x18] sm:$0xff]
  %v151 = vld [vmem:[%s3 + $0x20] sm:$0xff]
  %v152 = vld [vmem:[%s3 + $0x28] sm:$0xff]
  %v153 = vld [vmem:[%s3 + $0x30] sm:$0xff]
  %v154 = vld [vmem:[%s3 + $0x38] sm:$0xff]
  %v155 = vld [vmem:[%s3 + $0x40] sm:$0xff]
  %v156 = vld [vmem:[%s3 + $0x48] sm:$0xff]
  %v157 = vld [vmem:[%s3 + $0x50] sm:$0xff]
  %v158 = vld [vmem:[%s3 + $0x58] sm:$0xff]
  %v159 = vld [vmem:[%s3 + $0x60] sm:$0xff]
  %v160 = vld [vmem:[%s3 + $0x68] sm:$0xff]
  %v161 = vld [vmem:[%s3 + $0x70] sm:$0xff]
  %v162 = vld [vmem:[%s3 + $0x78] sm:$0xff]
  %v163 = vld [vmem:[%s3 + $0x80] sm:$0xff]
  %v164 = vld [vmem:[%s3 + $0x88] sm:$0xff]
  %v165 = vld [vmem:[%s3 + $0x90] sm:$0xff]
  %v166 = vld [vmem:[%s3 + $0x98] sm:$0xff]
  %v167 = vld [vmem:[%s3 + $0xa0] sm:$0xff]
  %v168 = vld [vmem:[%s3 + $0xa8] sm:$0xff]
  %v169 = vld [vmem:[%s3 + $0xb0] sm:$0xff]
  %v170 = vld [vmem:[%s3 + $0xb8] sm:$0xff]
  %v171 = vld [vmem:[%s3 + $0xc0] sm:$0xff]
  %v172 = vld [vmem:[%s3 + $0xc8] sm:$0xff]
  %v173 = vld [vmem:[%s3 + $0xd0] sm:$0xff]
  %v174 = vld [vmem:[%s3 + $0xd8] sm:$0xff]
  %v175 = vld [vmem:[%s3 + $0xe0] sm:$0xff]
  %v176 = vld [vmem:[%s3 + $0xe8] sm:$0xff]
  %v177 = vld [vmem:[%s3 + $0xf0] sm:$0xff]
  %v178 = vld [vmem:[%s3 + $0xf8] sm:$0xff]
  %v179 = vld [vmem:[%s4] sm:$0x1]
  %v181 = vlaneseq
  %v182 = vshrl.u32 %v181, 7
  %v183 = vsub.s32 0, %v182
  %v184 = vrot.slane %v179, %v183
  %186 = vmatprep.subr.mxu0 0.0
  %187 = vmatpush1.msra.mxu0 %v162
  %188 = vmatprep.subr.mxu0 0.0
  %189 = vmatpush1.msra.mxu0 %v161
  %190 = vmatprep.subr.mxu0 0.0
  %191 = vmatpush1.msra.mxu0 %v160
  %192 = vmatprep.subr.mxu0 0.0
  %193 = vmatpush1.msra.mxu0 %v159
  %194 = vmatprep.subr.mxu0 0.0
  %195 = vmatpush1.msra.mxu0 %v158
  %196 = vmatprep.subr.mxu0 0.0
  %197 = vmatpush1.msra.mxu0 %v157
  %198 = vmatprep.subr.mxu0 0.0
  %199 = vmatpush1.msra.mxu0 %v156
  %200 = vmatprep.subr.mxu0 0.0
  %201 = vmatpush1.msra.mxu0 %v155
  %202 = vmatprep.subr.mxu0 0.0
  %203 = vmatpush1.msra.mxu0 %v154
  %204 = vmatprep.subr.mxu0 0.0
  %205 = vmatpush1.msra.mxu0 %v153
  %206 = vmatprep.subr.mxu0 0.0
  %207 = vmatpush1.msra.mxu0 %v152
  %208 = vmatprep.subr.mxu0 0.0
  %209 = vmatpush1.msra.mxu0 %v151
  %210 = vmatprep.subr.mxu0 0.0
  %211 = vmatpush1.msra.mxu0 %v150
  %212 = vmatprep.subr.mxu0 0.0
  %213 = vmatpush1.msra.mxu0 %v149
  %214 = vmatprep.subr.mxu0 0.0
  %215 = vmatpush1.msra.mxu0 %v148
  %216 = vmatprep.subr.mxu0 0.0
  %217 = vmatpush1.msra.mxu0 %v147
  %218 = vmatprep.subr.mxu0 0.0
  %219 = vmatpush2.msra.mxu0 %v178
  %220 = vmatprep.subr.mxu0 0.0
  %221 = vmatpush2.msra.mxu0 %v177
  %222 = vmatprep.subr.mxu0 0.0
  %223 = vmatpush2.msra.mxu0 %v176
  %224 = vmatprep.subr.mxu0 0.0
  %225 = vmatpush2.msra.mxu0 %v175
  %226 = vmatprep.subr.mxu0 0.0
  %227 = vmatpush2.msra.mxu0 %v174
  %228 = vmatprep.subr.mxu0 0.0
  %229 = vmatpush2.msra.mxu0 %v173
  %230 = vmatprep.subr.mxu0 0.0
  %231 = vmatpush2.msra.mxu0 %v172
  %232 = vmatprep.subr.mxu0 0.0
  %233 = vmatpush2.msra.mxu0 %v171
  %234 = vmatprep.subr.mxu0 0.0
  %235 = vmatpush2.msra.mxu0 %v170
  %236 = vmatprep.subr.mxu0 0.0
  %237 = vmatpush2.msra.mxu0 %v169
  %238 = vmatprep.subr.mxu0 0.0
  %239 = vmatpush2.msra.mxu0 %v168
  %240 = vmatprep.subr.mxu0 0.0
  %241 = vmatpush2.msra.mxu0 %v167
  %242 = vmatprep.subr.mxu0 0.0
  %243 = vmatpush2.msra.mxu0 %v166
  %244 = vmatprep.subr.mxu0 0.0
  %245 = vmatpush2.msra.mxu0 %v165
  %246 = vmatprep.subr.mxu0 0.0
  %247 = vmatpush2.msra.mxu0 %v164
  %248 = vmatprep.subr.mxu0 0.0
  %249 = vmatpush2.msra.mxu0 %v163
  %250 = vmatprep.mubr.f32.mxu0 %v144
  %251 = vmatmul.mubr.f32.gmra.mxu0 %v143
  %v252 = vpop.f32.mrf.mxu0
  %v253 = vadd.f32 %v184, %v252
  %v254 = vpop.f32.mrf.mxu0
  %255 = vmatprep.mubr.f32.mxu0 %v146
  %256 = vmatmul.mubr.f32.gmra.mxu0 %v145
  %v257 = vpop.f32.mrf.mxu0
  %v258 = vadd.f32 %v184, %v257
  %v259 = vpop.f32.mrf.mxu0
  %260 = vdwg.mxu0
  %v261 = vmax.f32 %v253, 0.0
  %v262 = vmax.f32 %v258, 0.0
  %263 = vst [vmem:[%s5] sm:$0xff] %v261
  %264 = vst [vmem:[%s5 + $0x8] sm:$0xff] %v262
  // Predicated region
  $region22: #{particle_encoder.1} parent=0 // pred_check
    _
  $region23: #{particle_encoder.1} parent=0 // pred_check_branch
    %266 = sbr.rel (0) target = $region25
  $region24: #{particle_encoder.1} parent=0 // pred_region
    _
  $region25: #{particle_encoder.1} parent=0 // pred_fallthru
    _
  // Predicated region
  $region26: #{particle_encoder.1} parent=0 // pred_check
    _
  $region27: #{particle_encoder.1} parent=0 // pred_check_branch
    %268 = sbr.rel (0) target = $region29
  $region28: #{particle_encoder.1} parent=0 // pred_region
    _
  $region29: #{particle_encoder.1} parent=0 // pred_fallthru
    _

</llo_original>
